<compile_context>
chip_gen: v7x
topology: tpu7x:2x2x1
jax: 0.10.0
libtpu: 0.0.40
codegen_flags: <defaults>
</compile_context>

<pallas_src>
import random

import jax
import jax.numpy as jnp
from jax.experimental import pallas as pl
from jax.experimental.pallas import tpu as pltpu


def _round_up(x, m):
    return ((x + m - 1) // m) * m


def _sublane_multiple(dtype):
    itemsize = jnp.dtype(dtype).itemsize
    if itemsize >= 4:
        return 8
    if itemsize == 2:
        return 16
    return 32


def _vmem_budget_and_limit():
    """Generation-aware (combined input block budget, scoped VMEM limit)."""
    try:
        info = pltpu.get_tpu_info()
        cap = int(getattr(info, "vmem_capacity_bytes", 64 << 20))
    except Exception:
        cap = 64 << 20
    if cap >= (96 << 20):        # v5e / v6e: 128 MiB physical VMEM
        return 8 << 20, 48 << 20
    return 4 << 20, 24 << 20     # v7x: 64 MiB physical VMEM


def _crop_pair_kernel(img_ref, msk_ref, img_out_ref, msk_out_ref):
    # Input blocks are the bucketed window; outputs are the exact crop size.
    # Slices below are static (ref shapes are Python constants).
    ih, iw = img_out_ref.shape[2], img_out_ref.shape[3]
    img_out_ref[...] = img_ref[:, :, :ih, :iw]
    mh, mw = msk_out_ref.shape[2], msk_out_ref.shape[3]
    msk_out_ref[...] = msk_ref[:, :, :mh, :mw]


def upper_left_crop_pair(image, mask, new_h, new_w, *, min_kernel_bytes=1 << 20):
    """Crop image (N,Ci,H,W) and mask (N,Cm,H,W) [or (N,H,W)] to their
    upper-left (new_h, new_w) windows with one fused Pallas copy kernel."""
    squeeze_mask = False
    if mask.ndim == 3:  # (N, H, W) -> (N, 1, H, W)
        mask = mask[:, None]
        squeeze_mask = True

    n, ci, h, w = image.shape
    nm, cm, hm, wm = mask.shape
    assert (n, h, w) == (nm, hm, wm), "image/mask must share batch and spatial dims"

    new_h = max(0, min(int(new_h), h))
    new_w = max(0, min(int(new_w), w))

    def _native():
        io = image[:, :, :new_h, :new_w]
        mo = mask[:, :, :new_h, :new_w]
        return io, (mo[:, 0] if squeeze_mask else mo)

    # Degenerate crop: keep semantics without launching a kernel.
    if new_h == 0 or new_w == 0:
        return _native()

    # Tiny crops: dispatch + pipeline prologue dominates; native slice wins.
    out_bytes = (n * ci * image.dtype.itemsize
                 + n * cm * mask.dtype.itemsize) * new_h * new_w
    if out_bytes < min_kernel_bytes:
        return _native()

    sub = max(_sublane_multiple(image.dtype), _sublane_multiple(mask.dtype))

    # Bucketed input window: only these bytes are ever DMA'd from HBM.
    hp = min(_round_up(new_h, sub), h)
    wp = min(_round_up(new_w, 128), w)

    budget, vmem_limit = _vmem_budget_and_limit()

    # H-tile so the combined (image+mask) input block stays under the budget.
    row_bytes = (ci * image.dtype.itemsize + cm * mask.dtype.itemsize) * wp
    if hp * row_bytes <= budget:
        th = hp
    else:
        th = min(hp, max(sub, (budget // row_bytes) // sub * sub))

    # Ensure >= 2 grid steps when possible (megacore work on v7x, DMA overlap).
    if n == 1 and pl.cdiv(hp, th) == 1 and hp >= 2 * sub:
        th = _round_up(pl.cdiv(hp, 2), sub)

    grid_h = pl.cdiv(hp, th)
    grid = (n, grid_h)

    # Exact-size output blocks: no post-kernel trim pass over HBM.
    th_out = th if grid_h > 1 else min(th, new_h)

    img_in_spec = pl.BlockSpec((1, ci, th, wp), lambda b, hb: (b, 0, hb, 0))
    msk_in_spec = pl.BlockSpec((1, cm, th, wp), lambda b, hb: (b, 0, hb, 0))
    img_out_spec = pl.BlockSpec((1, ci, th_out, new_w), lambda b, hb: (b, 0, hb, 0))
    msk_out_spec = pl.BlockSpec((1, cm, th_out, new_w), lambda b, hb: (b, 0, hb, 0))

    img_out, msk_out = pl.pallas_call(
        _crop_pair_kernel,
        out_shape=(
            jax.ShapeDtypeStruct((n, ci, new_h, new_w), image.dtype),
            jax.ShapeDtypeStruct((n, cm, new_h, new_w), mask.dtype),
        ),
        grid=grid,
        in_specs=(img_in_spec, msk_in_spec),
        out_specs=(img_out_spec, msk_out_spec),
        compiler_params=pltpu.CompilerParams(
            dimension_semantics=("parallel", "parallel"),
            vmem_limit_bytes=vmem_limit),
    )(image, mask)

    return img_out, (msk_out[:, 0] if squeeze_mask else msk_out)


class UpperLeftCrop:
    """JAX/Pallas port of the PyTorch UpperLeftCrop noise layer.

    The PyTorch forward calls RandomCrop.get_params but then crops at (0, 0),
    so only the crop *size* matters; the random offsets are discarded.
    """

    def __init__(self, min_size=None, max_size=None, seed=0, min_kernel_bytes=1 << 20):
        self.min_size = min_size
        self.max_size = max_size
        self.min_kernel_bytes = min_kernel_bytes
        self._rng = random.Random(seed)  # host-side RNG for the random-size path

    def get_random_size(self, h, w):
        if self.min_size is None or self.max_size is None:
            raise ValueError("min_size and max_size must be provided")
        return (
            self._rng.randint(int(self.min_size * h), int(self.max_size * h)),
            self._rng.randint(int(self.min_size * w), int(self.max_size * w)),
        )

    def forward(self, image, mask, size=None):
        h, w = image.shape[-2], image.shape[-1]
        if size is None:
            new_h, new_w = self.get_random_size(h, w)
        else:
            new_h, new_w = int(size * h), int(size * w)
        return upper_left_crop_pair(image, mask, new_h, new_w,
                                    min_kernel_bytes=self.min_kernel_bytes)

    __call__ = forward


if __name__ == "__main__":
    key = jax.random.PRNGKey(0)
    k_img, k_msk, k_img2, k_msk2 = jax.random.split(key, 4)

    # Small NCHW inputs; force the kernel path even at this size.
    image = jax.random.normal(k_img, (2, 4, 16, 16), dtype=jnp.float32)
    mask = jax.random.normal(k_msk, (2, 1, 16, 16), dtype=jnp.float32)

    layer = UpperLeftCrop(min_size=0.25, max_size=0.75, min_kernel_bytes=0)

    # Deterministic crop: output spatial = (8, 8).
    img_out, msk_out = layer(image, mask, size=0.5)
    jax.block_until_ready((img_out, msk_out))
    assert img_out.shape == (2, 4, 8, 8)
    assert msk_out.shape == (2, 1, 8, 8)
    assert jnp.array_equal(img_out, image[..., :8, :8])
    assert jnp.array_equal(msk_out, mask[..., :8, :8])

    # Non-128 / non-8 aligned crop: exact-size output written in-kernel.
    img_out2, msk_out2 = layer(image, mask, size=0.75)
    jax.block_until_ready((img_out2, msk_out2))
    assert img_out2.shape == (2, 4, 12, 12)
    assert jnp.array_equal(img_out2, image[..., :12, :12])
    assert jnp.array_equal(msk_out2, mask[..., :12, :12])

    # Random-size path.
    img_out3, msk_out3 = layer(image, mask)
    jax.block_until_ready((img_out3, msk_out3))
    nh, nw = img_out3.shape[-2], img_out3.shape[-1]
    assert jnp.array_equal(img_out3, image[..., :nh, :nw])
    assert jnp.array_equal(msk_out3, mask[..., :nh, :nw])

    # bf16 image + 3-D mask path (dtype-aware sublane bucketing, mask squeeze).
    image_b = jax.random.normal(k_img2, (1, 3, 32, 32), dtype=jnp.bfloat16)
    mask_b = jax.random.normal(k_msk2, (1, 32, 32), dtype=jnp.float32)
    img_out4, msk_out4 = layer(image_b, mask_b, size=0.5)
    jax.block_until_ready((img_out4, msk_out4))
    assert img_out4.shape == (1, 3, 16, 16)
    assert msk_out4.shape == (1, 16, 16)
    assert jnp.array_equal(img_out4, image_b[..., :16, :16])
    assert jnp.array_equal(msk_out4, mask_b[..., :16, :16])

    print("KERNEL_OK")
</pallas_src>

<mosaic_0001>
module attributes {stable_mosaic.version = 11 : i64} {
  func.func @_crop_pair_kernel(%arg0: i32, %arg1: i32, %arg2: memref<1x4x8x16xf32, #tpu.memory_space<vmem>>, %arg3: memref<1x1x8x16xf32, #tpu.memory_space<vmem>>, %arg4: memref<1x4x8x8xf32, #tpu.memory_space<vmem>>, %arg5: memref<1x1x8x8xf32, #tpu.memory_space<vmem>>) attributes {dimension_semantics = [#tpu.dimension_semantics<parallel>, #tpu.dimension_semantics<parallel>], iteration_bounds = array<i64: 2, 1>, scalar_prefetch = 0 : i64, scratch_operands = 0 : i64, tpu.core_type = #tpu.core_type<tc>, window_params = [{transform_indices = @transform_0, window_bounds = array<i64: 1, 4, 8, 16>}, {transform_indices = @transform_1, window_bounds = array<i64: 1, 1, 8, 16>}, {transform_indices = @transform_2, window_bounds = array<i64: 1, 4, 8, 8>}, {transform_indices = @transform_3, window_bounds = array<i64: 1, 1, 8, 8>}]} {
    %c0 = arith.constant 0 : index
    %c0_0 = arith.constant 0 : index
    %c0_1 = arith.constant 0 : index
    %c0_2 = arith.constant 0 : index
    %0 = vector.load %arg2[%c0, %c0_0, %c0_1, %c0_2] : memref<1x4x8x16xf32, #tpu.memory_space<vmem>>, vector<1x4x8x8xf32>
    %c0_3 = arith.constant 0 : index
    %c0_4 = arith.constant 0 : index
    %c0_5 = arith.constant 0 : index
    %c0_6 = arith.constant 0 : index
    %1 = vector.load %arg4[%c0_3, %c0_4, %c0_5, %c0_6] : memref<1x4x8x8xf32, #tpu.memory_space<vmem>>, vector<1x4x8x8xf32>
    tpu.vector_store %arg4[%c0_3, %c0_4, %c0_5, %c0_6], %0 {strides = array<i32>} : memref<1x4x8x8xf32, #tpu.memory_space<vmem>>, vector<1x4x8x8xf32>,
    %c0_7 = arith.constant 0 : index
    %c0_8 = arith.constant 0 : index
    %c0_9 = arith.constant 0 : index
    %c0_10 = arith.constant 0 : index
    %2 = vector.load %arg3[%c0_7, %c0_8, %c0_9, %c0_10] : memref<1x1x8x16xf32, #tpu.memory_space<vmem>>, vector<1x1x8x8xf32>
    %c0_11 = arith.constant 0 : index
    %c0_12 = arith.constant 0 : index
    %c0_13 = arith.constant 0 : index
    %c0_14 = arith.constant 0 : index
    %3 = vector.load %arg5[%c0_11, %c0_12, %c0_13, %c0_14] : memref<1x1x8x8xf32, #tpu.memory_space<vmem>>, vector<1x1x8x8xf32>
    tpu.vector_store %arg5[%c0_11, %c0_12, %c0_13, %c0_14], %2 {strides = array<i32>} : memref<1x1x8x8xf32, #tpu.memory_space<vmem>>, vector<1x1x8x8xf32>,
    return
  }
  func.func @transform_0(%arg0: i32, %arg1: i32) -> (i32, i32, i32, i32) {
    %c0_i32 = arith.constant 0 : i32
    %c0_i32_0 = arith.constant 0 : i32
    %c0_i32_1 = arith.constant 0 : i32
    return %arg0, %c0_i32, %arg1, %c0_i32_0 : i32, i32, i32, i32
  }
  func.func @transform_1(%arg0: i32, %arg1: i32) -> (i32, i32, i32, i32) {
    %c0_i32 = arith.constant 0 : i32
    %c0_i32_0 = arith.constant 0 : i32
    %c0_i32_1 = arith.constant 0 : i32
    return %arg0, %c0_i32, %arg1, %c0_i32_0 : i32, i32, i32, i32
  }
  func.func @transform_2(%arg0: i32, %arg1: i32) -> (i32, i32, i32, i32) {
    %c0_i32 = arith.constant 0 : i32
    %c0_i32_0 = arith.constant 0 : i32
    %c0_i32_1 = arith.constant 0 : i32
    return %arg0, %c0_i32, %arg1, %c0_i32_0 : i32, i32, i32, i32
  }
  func.func @transform_3(%arg0: i32, %arg1: i32) -> (i32, i32, i32, i32) {
    %c0_i32 = arith.constant 0 : i32
    %c0_i32_0 = arith.constant 0 : i32
    %c0_i32_1 = arith.constant 0 : i32
    return %arg0, %c0_i32, %arg1, %c0_i32_0 : i32, i32, i32, i32
  }
}

</mosaic_0001>

<llo_original>
// kernel: tpu_custom_call.1
$region0: #{tpu_custom_call.1}
  #allocation0 [shape = 'u32[]', space=smem, size = 0x4, offset = 0x4, fixed_abs, tag = 'smem constant byte address 0x4 - core index']
  #allocation1 [shape = 'u32[144,128]{1,0:T(1,128)}', space=vmem, size = 0x12000, scoped, tag = 'internal scratch']
  %s0 = inlined_call_operand.hbm [shape: f32[2,4,16,16], index: 0, kind: input, shape index: {}]
  %s1 = inlined_call_operand.hbm [shape: f32[2,1,16,16], index: 1, kind: input, shape index: {}]
  %s2 = inlined_call_operand.hbm [shape: f32[2,4,8,8], index: 2, kind: output, shape index: {0}]
  %s3 = inlined_call_operand.hbm [shape: f32[2,1,8,8], index: 3, kind: output, shape index: {1}]
  %4 = xla_tuple %s2, %s3
  %s5 = sld [smem:[#allocation0]]
  $region57: #{tpu_custom_call.1} parent=0
    _
  %s7 = ssub.s32 1, %s5
  %s8 = scalar_select 0, %s7, %s5
  $region1: #{tpu_custom_call.1} parent=0
    #allocation2 [shape = 'u8[32768]{0}', space=vmem, size = 0x8000, scoped, tag = 'input window, operand 0']
    #allocation3 [shape = 's32[2]{0}', space=sflag, size = 0x8, scoped, tag = 'scoped memory for tpu_custom_call.1']
    #allocation4 [shape = 's32[2]{0}', space=sflag, size = 0x8, scoped, tag = 'scoped memory for tpu_custom_call.1']
    #allocation5 [shape = 'u8[8192]{0}', space=vmem, size = 0x2000, scoped, tag = 'input window, operand 1']
    #allocation6 [shape = 's32[2]{0}', space=sflag, size = 0x8, scoped, tag = 'scoped memory for tpu_custom_call.1']
    #allocation7 [shape = 'u8[32768]{0}', space=vmem, size = 0x8000, scoped, tag = 'output window, operand 0']
    #allocation8 [shape = 'u8[8192]{0}', space=vmem, size = 0x2000, scoped, tag = 'output window, operand 1']
    #allocation9 [shape = 's32[2]{0}', space=sflag, size = 0x8, scoped, tag = 'scoped memory for tpu_custom_call.1']
    %9 = vsyncpa [#allocation3], 0
    %s10 = scalar_lea.sflag [#allocation3], 1
    %11 = vsyncpa %s10, 0
    %12 = vsyncpa [#allocation6], 0
    %s13 = scalar_lea.sflag [#allocation6], 1
    %14 = vsyncpa %s13, 0
    %15 = vsyncpa [#allocation4], 0
    %s16 = scalar_lea.sflag [#allocation4], 1
    %17 = vsyncpa %s16, 0
    %18 = vsyncpa [#allocation9], 0
    %s19 = scalar_lea.sflag [#allocation9], 1
    %20 = vsyncpa %s19, 0
    loop: start=0, step=1, limit=4
    $region2: #{tpu_custom_call.1} parent=1 // loop_pre_header
      _
    $region3: #{tpu_custom_call.1} parent=1 // loop_header
      %s22 = sphi 0, %s26
      %p23 = scmp.ge.s32.totalorder %s22, 4
      %s29 = sphi 0, %s41
      %s30 = sphi 0, %s37
      %s31 = sphi 0, %s29
      %s32 = sphi 0, %s30
      %s33 = sphi 0, %s31
      %s34 = sphi 0, %s32
      %s46 = sphi 0, %s48
      %s49 = sphi 0, %s46
      %s50 = sphi 0, %s49
      %s66 = sphi 0, %s50
      %s74 = sphi 0, %s76
      %s77 = sphi 0, %s74
      %s78 = sphi 0, %s77
      %s94 = sphi 0, %s78
      %s102 = sphi 0, %s104
      %s105 = sphi 0, %s102
      %s106 = sphi 0, %s105
      %s122 = sphi 0, %s106
      %s130 = sphi 0, %s132
      %s133 = sphi 0, %s130
      %s134 = sphi 0, %s133
      %s150 = sphi 0, %s134
    $region4: #{tpu_custom_call.1} parent=1 // loop_header_branch
      %25 = sbr.rel (%p23) target = $region8
    $region5: #{tpu_custom_call.1} parent=1 // loop_body
      %s27 = ssub.s32 %s22, 1
      %s28 = ssub.s32 %s22, 2
      %s35 = sadd.s32 1, %s30
      %p36 = scmp.ge.s32.totalorder %s35, 1
      %s37 = scalar_select %p36, 0, %s35
      %s38 = sadd.s32 1, %s29
      %s39 = scalar_select %p36, %s38, %s29
      %p40 = scmp.ge.s32.totalorder %s39, 2
      %s41 = scalar_select %p40, 0, %s39
      %s42 = ssub.s32 %s29, %s41
      %s43 = ssub.s32 %s30, %s37
      %s44 = sor.u32 %s42, %s43
      %p45 = scmp.eq.s32.totalorder %s44, 0
      %s47 = sadd.s32 %s46, 1
      %s48 = scalar_select %p45, %s46, %s47
      %p51 = pneg %p45
      %p52 = scmp.eq.s32.totalorder %s22, 1
      %p53 = por %p51, %p52
      %p54 = scmp.ne.s32.totalorder %s46, %s49
      %p55 = scmp.eq.s32.totalorder %s22, 0
      %p56 = por %p54, %p55
      %p57 = scmp.ne.s32.totalorder %s46, %s49
      %p58 = scmp.eq.s32.totalorder %s27, 1
      %p59 = por %p57, %p58
      %p60 = scmp.ne.s32.totalorder %s49, %s50
      %p61 = scmp.eq.s32.totalorder %s27, 0
      %p62 = por %p60, %p61
      %p63 = scmp.ne.s32.totalorder %s49, %s50
      %p64 = scmp.eq.s32.totalorder %s28, 1
      %p65 = por %p63, %p64
      %p67 = scmp.ne.s32.totalorder %s50, %s66
      %p68 = scmp.eq.s32.totalorder %s28, 0
      %p69 = por %p67, %p68
      %s70 = ssub.s32 %s29, %s41
      %s71 = ssub.s32 %s30, %s37
      %s72 = sor.u32 %s70, %s71
      %p73 = scmp.eq.s32.totalorder %s72, 0
      %s75 = sadd.s32 %s74, 1
      %s76 = scalar_select %p73, %s74, %s75
      %p79 = pneg %p73
      %p80 = scmp.eq.s32.totalorder %s22, 1
      %p81 = por %p79, %p80
      %p82 = scmp.ne.s32.totalorder %s74, %s77
      %p83 = scmp.eq.s32.totalorder %s22, 0
      %p84 = por %p82, %p83
      %p85 = scmp.ne.s32.totalorder %s74, %s77
      %p86 = scmp.eq.s32.totalorder %s27, 1
      %p87 = por %p85, %p86
      %p88 = scmp.ne.s32.totalorder %s77, %s78
      %p89 = scmp.eq.s32.totalorder %s27, 0
      %p90 = por %p88, %p89
      %p91 = scmp.ne.s32.totalorder %s77, %s78
      %p92 = scmp.eq.s32.totalorder %s28, 1
      %p93 = por %p91, %p92
      %p95 = scmp.ne.s32.totalorder %s78, %s94
      %p96 = scmp.eq.s32.totalorder %s28, 0
      %p97 = por %p95, %p96
      %s98 = ssub.s32 %s29, %s41
      %s99 = ssub.s32 %s30, %s37
      %s100 = sor.u32 %s98, %s99
      %p101 = scmp.eq.s32.totalorder %s100, 0
      %s103 = sadd.s32 %s102, 1
      %s104 = scalar_select %p101, %s102, %s103
      %p107 = pneg %p101
      %p108 = scmp.eq.s32.totalorder %s22, 1
      %p109 = por %p107, %p108
      %p110 = scmp.ne.s32.totalorder %s102, %s105
      %p111 = scmp.eq.s32.totalorder %s22, 0
      %p112 = por %p110, %p111
      %p113 = scmp.ne.s32.totalorder %s102, %s105
      %p114 = scmp.eq.s32.totalorder %s27, 1
      %p115 = por %p113, %p114
      %p116 = scmp.ne.s32.totalorder %s105, %s106
      %p117 = scmp.eq.s32.totalorder %s27, 0
      %p118 = por %p116, %p117
      %p119 = scmp.ne.s32.totalorder %s105, %s106
      %p120 = scmp.eq.s32.totalorder %s28, 1
      %p121 = por %p119, %p120
      %p123 = scmp.ne.s32.totalorder %s106, %s122
      %p124 = scmp.eq.s32.totalorder %s28, 0
      %p125 = por %p123, %p124
      %s126 = ssub.s32 %s29, %s41
      %s127 = ssub.s32 %s30, %s37
      %s128 = sor.u32 %s126, %s127
      %p129 = scmp.eq.s32.totalorder %s128, 0
      %s131 = sadd.s32 %s130, 1
      %s132 = scalar_select %p129, %s130, %s131
      %p135 = pneg %p129
      %p136 = scmp.eq.s32.totalorder %s22, 1
      %p137 = por %p135, %p136
      %p138 = scmp.ne.s32.totalorder %s130, %s133
      %p139 = scmp.eq.s32.totalorder %s22, 0
      %p140 = por %p138, %p139
      %p141 = scmp.ne.s32.totalorder %s130, %s133
      %p142 = scmp.eq.s32.totalorder %s27, 1
      %p143 = por %p141, %p142
      %p144 = scmp.ne.s32.totalorder %s133, %s134
      %p145 = scmp.eq.s32.totalorder %s27, 0
      %p146 = por %p144, %p145
      %p147 = scmp.ne.s32.totalorder %s133, %s134
      %p148 = scmp.eq.s32.totalorder %s28, 1
      %p149 = por %p147, %p148
      %p151 = scmp.ne.s32.totalorder %s134, %s150
      %p152 = scmp.eq.s32.totalorder %s28, 0
      %p153 = por %p151, %p152
      %p154 = scmp.le.s32.totalorder 1, %s22
      %p155 = scmp.lt.s32.totalorder %s22, 3
      %p156 = pnand %p154, %p155
      %p157 = pneg %p156
      // Predicated region
      $region9: #{tpu_custom_call.1} parent=5 // pred_check
        _
      $region10: #{tpu_custom_call.1} parent=5 // pred_check_branch
        %159 = sbr.rel (%p156) target = $region12
      $region11: #{tpu_custom_call.1} parent=5 // pred_region
        %s160 = ssub.s32 %s22, 1
      $region12: #{tpu_custom_call.1} parent=5 // pred_fallthru
        _
      %p161 = scmp.lt.s32.totalorder %s22, 2
      // Predicated region
      $region13: #{tpu_custom_call.1} parent=5 // pred_check
        %p162 = pneg %p161
      $region14: #{tpu_custom_call.1} parent=5 // pred_check_branch
        %164 = sbr.rel (%p162) target = $region16
      $region15: #{tpu_custom_call.1} parent=5 // pred_region
        // Predicated region
        $region17: #{tpu_custom_call.1} parent=15 // pred_check
          %p165 = pneg %p56
        $region18: #{tpu_custom_call.1} parent=15 // pred_check_branch
          %167 = sbr.rel (%p165) target = $region20
        $region19: #{tpu_custom_call.1} parent=15 // pred_region
          %s168 = sand.u32 %s46, 1
          %s169 = scalar_lea.sflag [#allocation3], %s168
          %s170 = sand.u32 %s46, 1
          %s171 = smul.addr %s170, 32
          %s172 = scalar_lea.vmem [#allocation2], %s171
          %s174 = ssub.s32 512, 512
          %175 = vsyncadd %s169, %s174
          %s176 = smul.addr %s29, 8
          %s177 = sadd.s32 %s30, %s176
          %s178 = smul.addr %s177, 128
          %s179 = scalar_lea.hbm %s0, %s178
          %s180 = sshll.u32 %s172, 4
          %s181 = int_to_ptr.vmem [resolvable:$true] %s180
          %186 = dma.hbm_to_vmem [thread:$0]  %s179, 512, %s181, %s169, 256, 128, 8
        $region20: #{tpu_custom_call.1} parent=15 // pred_fallthru
          _
        // Predicated region
        $region21: #{tpu_custom_call.1} parent=15 // pred_check
          %p187 = pneg %p84
        $region22: #{tpu_custom_call.1} parent=15 // pred_check_branch
          %189 = sbr.rel (%p187) target = $region24
        $region23: #{tpu_custom_call.1} parent=15 // pred_region
          %s190 = sand.u32 %s74, 1
          %s191 = scalar_lea.sflag [#allocation6], %s190
          %s192 = sand.u32 %s74, 1
          %s193 = smul.addr %s192, 8
          %s194 = scalar_lea.vmem [#allocation5], %s193
          %s196 = ssub.s32 128, 128
          %197 = vsyncadd %s191, %s196
          %s198 = smul.addr %s29, 2
          %s199 = sadd.s32 %s30, %s198
          %s200 = smul.addr %s199, 128
          %s201 = scalar_lea.hbm %s1, %s200
          %s203 = sshll.u32 %s194, 4
          %s204 = int_to_ptr.vmem [resolvable:$true] %s203
          %206 = dma.hbm_to_vmem [thread:$0]  %s201, 128, %s204, %s191
        $region24: #{tpu_custom_call.1} parent=15 // pred_fallthru
          _
      $region16: #{tpu_custom_call.1} parent=5 // pred_fallthru
        _
      %p207 = scmp.le.s32.totalorder 1, %s22
      %p208 = scmp.lt.s32.totalorder %s22, 3
      %p209 = pnand %p207, %p208
      %p210 = pneg %p209
      // Predicated region
      $region25: #{tpu_custom_call.1} parent=5 // pred_check
        _
      $region26: #{tpu_custom_call.1} parent=5 // pred_check_branch
        %212 = sbr.rel (%p209) target = $region28
      $region27: #{tpu_custom_call.1} parent=5 // pred_region
        %s213 = ssub.s32 %s22, 1
        %s214 = sand.u32 %s49, 1
        %s215 = scalar_lea.sflag [#allocation3], %s214
        %s216 = sand.u32 %s49, 1
        %s217 = smul.addr %s216, 32
        %s218 = scalar_lea.vmem [#allocation2], %s217
        // Predicated region
        $region29: #{tpu_custom_call.1} parent=27 // pred_check
          %p219 = pneg %p62
        $region30: #{tpu_custom_call.1} parent=27 // pred_check_branch
          %221 = sbr.rel (%p219) target = $region32
        $region31: #{tpu_custom_call.1} parent=27 // pred_region
          %222 = dma.done %s215, 512
        $region32: #{tpu_custom_call.1} parent=27 // pred_fallthru
          _
        %s223 = sand.u32 %s77, 1
        %s224 = scalar_lea.sflag [#allocation6], %s223
        %s225 = sand.u32 %s77, 1
        %s226 = smul.addr %s225, 8
        %s227 = scalar_lea.vmem [#allocation5], %s226
        // Predicated region
        $region33: #{tpu_custom_call.1} parent=27 // pred_check
          %p228 = pneg %p90
        $region34: #{tpu_custom_call.1} parent=27 // pred_check_branch
          %230 = sbr.rel (%p228) target = $region36
        $region35: #{tpu_custom_call.1} parent=27 // pred_region
          %231 = dma.done %s224, 128
        $region36: #{tpu_custom_call.1} parent=27 // pred_fallthru
          _
        %s232 = sand.u32 %s49, 1
        %s233 = scalar_lea.sflag [#allocation3], %s232
        %s234 = sand.u32 %s49, 1
        %s235 = smul.addr %s234, 32
        %s236 = scalar_lea.vmem [#allocation2], %s235
        %p237 = pneg %p62
        %p238 = pneg %p59
        %s239 = sand.u32 %s77, 1
        %s240 = scalar_lea.sflag [#allocation6], %s239
        %s241 = sand.u32 %s77, 1
        %s242 = smul.addr %s241, 8
        %s243 = scalar_lea.vmem [#allocation5], %s242
        %p244 = pneg %p90
        %p245 = pneg %p87
        %p246 = pneg %p118
        %p247 = pneg %p115
        %s248 = sand.u32 %s105, 1
        %s249 = scalar_lea.sflag [#allocation4], %s248
        %s250 = sand.u32 %s105, 1
        %s251 = smul.addr %s250, 32
        %s252 = scalar_lea.vmem [#allocation7], %s251
        %p253 = pneg %p146
        %p254 = pneg %p143
        %s255 = sand.u32 %s133, 1
        %s256 = scalar_lea.sflag [#allocation9], %s255
        %s257 = sand.u32 %s133, 1
        %s258 = smul.addr %s257, 8
        %s259 = scalar_lea.vmem [#allocation8], %s258
        %v260 = vld [vmem:[%s218] sm:$0xff]
        %v261 = vld [vmem:[%s218 + $0x8] sm:$0xff]
        %v262 = vld [vmem:[%s218 + $0x10] sm:$0xff]
        %v263 = vld [vmem:[%s218 + $0x18] sm:$0xff]
        %vm264 = vcmask 64512
        %265 = vst.msk [vmem:[%s252] sm:$0xff] %vm264, %v260
        %266 = vst.msk [vmem:[%s252 + $0x8] sm:$0xff] %vm264, %v261
        %267 = vst.msk [vmem:[%s252 + $0x10] sm:$0xff] %vm264, %v262
        %268 = vst.msk [vmem:[%s252 + $0x18] sm:$0xff] %vm264, %v263
        %v269 = vld [vmem:[%s227] sm:$0xff]
        %270 = vst.msk [vmem:[%s259] sm:$0xff] %vm264, %v269
        %s271 = sand.u32 %s105, 1
        %s272 = scalar_lea.sflag [#allocation4], %s271
        %s273 = sand.u32 %s105, 1
        %s274 = smul.addr %s273, 32
        %s275 = scalar_lea.vmem [#allocation7], %s274
        %s276 = sand.u32 %s133, 1
        %s277 = scalar_lea.sflag [#allocation9], %s276
        %s278 = sand.u32 %s133, 1
        %s279 = smul.addr %s278, 8
        %s280 = scalar_lea.vmem [#allocation8], %s279
        // Predicated region
        $region37: #{tpu_custom_call.1} parent=27 // pred_check
          %p281 = pneg %p115
        $region38: #{tpu_custom_call.1} parent=27 // pred_check_branch
          %283 = sbr.rel (%p281) target = $region40
        $region39: #{tpu_custom_call.1} parent=27 // pred_region
          %s285 = ssub.s32 512, 512
          %286 = vsyncadd %s272, %s285
          %s287 = smul.addr %s31, 4
          %s288 = sadd.s32 %s32, %s287
          %s289 = smul.addr %s288, 128
          %s290 = scalar_lea.hbm %s2, %s289
          %s291 = sshll.u32 %s275, 4
          %s292 = int_to_ptr.vmem [resolvable:$true] %s291
          %297 = dma.vmem_to_hbm [thread:$0]  %s292, 512, %s290, %s272, 128, 128, 8
        $region40: #{tpu_custom_call.1} parent=27 // pred_fallthru
          _
        // Predicated region
        $region41: #{tpu_custom_call.1} parent=27 // pred_check
          %p298 = pneg %p143
        $region42: #{tpu_custom_call.1} parent=27 // pred_check_branch
          %300 = sbr.rel (%p298) target = $region44
        $region43: #{tpu_custom_call.1} parent=27 // pred_region
          %s302 = ssub.s32 128, 128
          %303 = vsyncadd %s277, %s302
          %s304 = sadd.s32 %s32, %s31
          %s305 = smul.addr %s304, 128
          %s306 = scalar_lea.hbm %s3, %s305
          %s308 = sshll.u32 %s280, 4
          %s309 = int_to_ptr.vmem [resolvable:$true] %s308
          %311 = dma.vmem_to_hbm [thread:$0]  %s309, 128, %s306, %s277
        $region44: #{tpu_custom_call.1} parent=27 // pred_fallthru
          _
      $region28: #{tpu_custom_call.1} parent=5 // pred_fallthru
        _
      %p312 = scmp.le.s32.totalorder 2, %s22
      // Predicated region
      $region45: #{tpu_custom_call.1} parent=5 // pred_check
        %p313 = pneg %p312
      $region46: #{tpu_custom_call.1} parent=5 // pred_check_branch
        %315 = sbr.rel (%p313) target = $region48
      $region47: #{tpu_custom_call.1} parent=5 // pred_region
        %s316 = ssub.s32 %s22, 2
        // Predicated region
        $region49: #{tpu_custom_call.1} parent=47 // pred_check
          %p317 = pneg %p121
        $region50: #{tpu_custom_call.1} parent=47 // pred_check_branch
          %319 = sbr.rel (%p317) target = $region52
        $region51: #{tpu_custom_call.1} parent=47 // pred_region
          %s320 = sand.u32 %s106, 1
          %s321 = scalar_lea.sflag [#allocation4], %s320
          %s322 = sand.u32 %s106, 1
          %s323 = smul.addr %s322, 32
          %s324 = scalar_lea.vmem [#allocation7], %s323
          %325 = dma.done %s321, 512
        $region52: #{tpu_custom_call.1} parent=47 // pred_fallthru
          _
        // Predicated region
        $region53: #{tpu_custom_call.1} parent=47 // pred_check
          %p326 = pneg %p149
        $region54: #{tpu_custom_call.1} parent=47 // pred_check_branch
          %328 = sbr.rel (%p326) target = $region56
        $region55: #{tpu_custom_call.1} parent=47 // pred_region
          %s329 = sand.u32 %s134, 1
          %s330 = scalar_lea.sflag [#allocation9], %s329
          %s331 = sand.u32 %s134, 1
          %s332 = smul.addr %s331, 8
          %s333 = scalar_lea.vmem [#allocation8], %s332
          %334 = dma.done %s330, 128
        $region56: #{tpu_custom_call.1} parent=47 // pred_fallthru
          _
      $region48: #{tpu_custom_call.1} parent=5 // pred_fallthru
        _
    $region6: #{tpu_custom_call.1} parent=1 // loop_footer
      %s26 = sadd.s32 1, %s22
    $region7: #{tpu_custom_call.1} parent=1 // loop_footer_branch
      %21 = sbr.rel target = $region3
    $region8: #{tpu_custom_call.1} parent=1 // loop_exit
      _
    %335 = vsyncpa [#allocation3], 1
    %s336 = scalar_lea.sflag [#allocation3], 1
    %337 = vsyncpa %s336, 1
    %338 = vsyncpa [#allocation6], 1
    %s339 = scalar_lea.sflag [#allocation6], 1
    %340 = vsyncpa %s339, 1
    %341 = vsyncpa [#allocation4], 1
    %s342 = scalar_lea.sflag [#allocation4], 1
    %343 = vsyncpa %s342, 1
    %344 = vsyncpa [#allocation9], 1
    %s345 = scalar_lea.sflag [#allocation9], 1
    %346 = vsyncpa %s345, 1

</llo_original>
